<compile_context>
chip_gen: v5e
topology: v5e:2x2
jax: 0.10.0
libtpu: 0.0.40
codegen_flags: <defaults>
</compile_context>

<pallas_src>
import functools

import jax
import jax.numpy as jnp
from jax.experimental import pallas as pl
from jax.experimental.pallas import tpu as pltpu

LANE = 128                       # TPU lane width: every kernel output last-dim == 128
_VMEM_LIMIT = 32 * 1024 * 1024   # explicit scoped-VMEM budget, fits v5e/v6e/v7x


# ----------------------------------------------------------------------------
# Pallas kernels
# ----------------------------------------------------------------------------
def _conv_chain_kernel(*refs, n_layers, acts):
    """Fused chain of (matmul + folded-BN bias + optional ReLU) layers.

    refs = (patches, w0, b0, w1, b1, ..., out). Every w_l has 128 output lanes
    (zero-padded); chained 1x1 layers keep the padded 128-channel activation in
    VMEM/vregs so intermediate activations never touch HBM.
    """
    p_ref = refs[0]
    o_ref = refs[-1]
    x = p_ref[...]                                       # bf16 (TM, K)
    for l in range(n_layers):
        w = refs[1 + 2 * l][...]                         # bf16 (K_l, 128)
        b = refs[2 + 2 * l][...]                         # f32  (1, 128)
        y = jnp.dot(x, w, preferred_element_type=jnp.float32) + b
        if acts[l]:
            y = jnp.maximum(y, 0.0)                      # ReLU (act_type)
        x = y.astype(jnp.bfloat16) if l < n_layers - 1 else y
    o_ref[...] = x.astype(o_ref.dtype)


def _avgpool_kernel(x_ref, o_ref, acc_ref, *, inv_hw):
    """AdaptiveAvgPool2d(1) + flatten: tiled mean over the spatial axis."""
    s = pl.program_id(0)

    @pl.when(s == 0)
    def _():
        acc_ref[...] = jnp.zeros_like(acc_ref)

    acc_ref[...] += jnp.sum(x_ref[...].astype(jnp.float32), axis=1)

    @pl.when(s == pl.num_programs(0) - 1)
    def _():
        o_ref[...] = (acc_ref[...] * inv_hw).astype(o_ref.dtype)


# ----------------------------------------------------------------------------
# Glue: im2col (layout plumbing only; compute stays inside the Pallas kernel)
# ----------------------------------------------------------------------------
def _im2col(x_nhwc, kh, kw, stride, pad):
    # TODO(synk): gather patches inside the kernel (overlapping-row BlockSpec) to
    # avoid the kh*kw HBM blow-up; for now patches are emitted in bf16 (half traffic).
    x = jnp.pad(x_nhwc, ((0, 0), (pad, pad), (pad, pad), (0, 0)))
    N, Hp, Wp, C = x.shape
    Ho = (Hp - kh) // stride + 1
    Wo = (Wp - kw) // stride + 1
    patches = []
    for i in range(kh):
        for j in range(kw):
            patches.append(
                x[:, i:i + stride * (Ho - 1) + 1:stride,
                     j:j + stride * (Wo - 1) + 1:stride, :])
    p = jnp.stack(patches, axis=3)                       # (N, Ho, Wo, kh*kw, C)
    p = p.reshape(N * Ho * Wo, kh * kw * C)              # (M, K): (kh, kw, C) order
    return p, (N, Ho, Wo)


def _pick_tm(m):
    if m >= 1024:
        return 512
    if m >= 256:
        return 256
    return max(8, ((m + 7) // 8) * 8)


# ----------------------------------------------------------------------------
# One fused block: kxk ConvLayer followed by any number of fused 1x1 ConvLayers
# (ConvLayer == Conv2d(bias=False) + eval BatchNorm2d + optional ReLU)
# ----------------------------------------------------------------------------
def conv_chain_block(x_nhwc, block):
    k, stride = block["k"], block["stride"]
    patches, (N, Ho, Wo) = _im2col(x_nhwc, k, k, stride, k // 2)   # bf16 (M, K)
    M, K = patches.shape
    TM = _pick_tm(M)
    n_tiles = (M + TM - 1) // TM
    Mp = n_tiles * TM
    if Mp != M:
        patches = jnp.pad(patches, ((0, Mp - M), (0, 0)))          # padded rows dropped later

    layers = block["layers"]
    acts = tuple(a for _, _, a in layers)

    in_specs = [pl.BlockSpec((TM, K), lambda i: (i, 0))]
    args = [patches]
    flops = 0
    bytes_accessed = Mp * K * 2 + Mp * LANE * 2                    # bf16 patches in + bf16 out
    for (w, b, _) in layers:                                       # weights stay VMEM-resident
        in_specs.append(pl.BlockSpec(w.shape, lambda i: (0, 0)))
        in_specs.append(pl.BlockSpec(b.shape, lambda i: (0, 0)))
        args += [w, b]
        flops += 2 * Mp * w.shape[0] * w.shape[1]
        bytes_accessed += w.size * w.dtype.itemsize + b.size * b.dtype.itemsize

    out = pl.pallas_call(
        functools.partial(_conv_chain_kernel, n_layers=len(layers), acts=acts),
        out_shape=jax.ShapeDtypeStruct((Mp, LANE), jnp.bfloat16),
        grid=(n_tiles,),
        in_specs=in_specs,
        out_specs=pl.BlockSpec((TM, LANE), lambda i: (i, 0)),
        compiler_params=pltpu.CompilerParams(
            dimension_semantics=("parallel",),
            vmem_limit_bytes=_VMEM_LIMIT),
        cost_estimate=pl.CostEstimate(flops=int(flops), transcendentals=0,
                                      bytes_accessed=int(bytes_accessed)),
    )(*args)
    return out[:M].reshape(N, Ho, Wo, LANE)                        # channels padded to 128


def global_avgpool(x_nhwc_pad):
    N, H, W, C = x_nhwc_pad.shape                                  # C == 128 (lane-dense)
    HW = H * W
    x = x_nhwc_pad.reshape(N, HW, C)
    THW = min(512, max(8, ((HW + 7) // 8) * 8))
    n_tiles = (HW + THW - 1) // THW
    HWp = n_tiles * THW
    if HWp != HW:
        x = jnp.pad(x, ((0, 0), (0, HWp - HW), (0, 0)))            # zero rows don't change the sum
    return pl.pallas_call(
        functools.partial(_avgpool_kernel, inv_hw=1.0 / float(HW)),
        out_shape=jax.ShapeDtypeStruct((N, C), jnp.float32),
        grid=(n_tiles,),
        in_specs=[pl.BlockSpec((N, THW, C), lambda s: (0, s, 0))],
        out_specs=pl.BlockSpec((N, C), lambda s: (0, 0)),
        scratch_shapes=[pltpu.VMEM((N, C), jnp.float32)],
        compiler_params=pltpu.CompilerParams(
            dimension_semantics=("arbitrary",),                    # reduction axis
            vmem_limit_bytes=_VMEM_LIMIT),
        cost_estimate=pl.CostEstimate(flops=N * HWp * C, transcendentals=0,
                                      bytes_accessed=N * HWp * C * 2 + N * C * 4),
    )(x)


# ----------------------------------------------------------------------------
# Deterministic parameter construction (mirrors the module's __init__ shapes)
# ----------------------------------------------------------------------------
def _make_conv_params(key, cin, cout, k, stride, use_act):
    """Conv2d(bias=False) + eval-mode BatchNorm2d folded into a matmul weight/bias."""
    k1, k2, k3, k4, k5 = jax.random.split(key, 5)
    fan_in = cin * k * k
    w = jax.random.normal(k1, (cout, cin, k, k), jnp.float32) / jnp.sqrt(float(fan_in))
    gamma = 1.0 + 0.1 * jax.random.normal(k2, (cout,), jnp.float32)
    beta = 0.1 * jax.random.normal(k3, (cout,), jnp.float32)
    run_mean = 0.1 * jax.random.normal(k4, (cout,), jnp.float32)
    run_var = 1.0 + 0.1 * jax.random.uniform(k5, (cout,), jnp.float32)
    eps = 1e-5
    scale = gamma / jnp.sqrt(run_var + eps)                        # folded eval BatchNorm
    bias = beta - run_mean * scale
    # im2col ordering is (kh, kw, cin); fold BN scale into the weight columns.
    w2 = jnp.transpose(w, (2, 3, 1, 0)).reshape(k * k * cin, cout) * scale[None, :]
    return dict(w2=w2, bias=bias, cin=cin, cout=cout, k=k, stride=stride, use_act=use_act)


def _assemble_block(layer_params):
    """Pack one spatial (kxk) layer + trailing 1x1 layers into one fused-kernel block."""
    first = layer_params[0]
    layers = []
    for idx, lp in enumerate(layer_params):
        w2 = lp["w2"]                                              # (K_real, cout_real)
        if idx > 0:
            # chained 1x1 conv consumes the padded 128-channel activation: pad rows
            w2 = jnp.pad(w2, ((0, LANE - w2.shape[0]), (0, 0)))
        w2 = jnp.pad(w2, ((0, 0), (0, LANE - w2.shape[1]))).astype(jnp.bfloat16)
        b = jnp.pad(lp["bias"], (0, LANE - lp["bias"].shape[0]))
        layers.append((w2, b.reshape(1, LANE).astype(jnp.float32), lp["use_act"]))
    return dict(k=first["k"], stride=first["stride"], cin=first["cin"],
                cout=layer_params[-1]["cout"], layers=layers)


def build_mobilenetv4_blocks(key):
    """Small MobileNetV4 config (task='classification') using 'conv' and 'fi' blocks.

    params: stem_out_channel=16, stem_kernel_size=3, stem_stride=2,
            final_conv_out_channel=64, final_conv_kernel_size=1, final_conv_stride=1,
            norm_type=batch_norm, act_type=relu
    stage_params:
      stage 0: [('conv', 16, 3, 2), ('conv', 16, 1, 1)]
      stage 1: [('fi', 32, 48, 3, 2)]      # FusedIB(in=16, hidden=48, out=32)
    Final ConvLayer(32 -> 64, k1, s1, act) is appended to the last stage.
    """
    keys = iter(jax.random.split(key, 8))
    stem = _make_conv_params(next(keys), 3, 16, 3, 2, True)        # conv_stem
    s0c1 = _make_conv_params(next(keys), 16, 16, 3, 2, True)       # stage0 conv
    s0c2 = _make_conv_params(next(keys), 16, 16, 1, 1, True)       # stage0 conv (1x1)
    fi1 = _make_conv_params(next(keys), 16, 48, 3, 2, True)        # FusedIB expand
    fi2 = _make_conv_params(next(keys), 48, 32, 1, 1, False)       # FusedIB project (no act)
    fin = _make_conv_params(next(keys), 32, 64, 1, 1, True)        # final conv
    # TODO(synk): 'uir' and 'mmqa' block types are not exercised by this config
    # (their class definitions were not provided); only 'conv' and 'fi' stages used.
    return [
        _assemble_block([stem]),                 # conv_stem
        _assemble_block([s0c1, s0c2]),           # stage 0: 3x3 + fused 1x1
        _assemble_block([fi1, fi2, fin]),        # stage 1: FusedIB + fused final conv
    ]


# ----------------------------------------------------------------------------
# Forward pass (matches MobileNetV4.forward for task='classification')
# ----------------------------------------------------------------------------
def mobilenetv4_forward(x_nchw, blocks):
    x = jnp.transpose(x_nchw, (0, 2, 3, 1)).astype(jnp.bfloat16)   # NCHW -> NHWC, bf16
    for i, blk in enumerate(blocks):                               # conv_stem + stages
        x = conv_chain_block(x, blk)                               # (N, Ho, Wo, 128) padded
        if i < len(blocks) - 1:
            x = x[..., :blk["cout"]]                               # real channels for next im2col
    pooled = global_avgpool(x)                                     # (N, 128) f32, lane-dense
    return pooled[:, :blocks[-1]["cout"]]                          # BackboneOutput.last_feature


if __name__ == "__main__":
    key = jax.random.PRNGKey(0)
    k_params, k_input = jax.random.split(key)

    blocks = build_mobilenetv4_blocks(k_params)
    x = jax.random.normal(k_input, (2, 3, 32, 32), jnp.float32)    # NCHW, like PyTorch

    out = mobilenetv4_forward(x, blocks)
    out = jax.block_until_ready(out)

    assert out.shape == (2, 64), out.shape
    assert out.dtype == jnp.float32
    assert bool(jnp.all(jnp.isfinite(out)))
    print("KERNEL_OK")
</pallas_src>

<mosaic_0001>
module attributes {stable_mosaic.version = 11 : i64} {
  func.func @_conv_chain_kernel(%arg0: i32, %arg1: memref<256x27xbf16, #tpu.memory_space<vmem>>, %arg2: memref<27x128xbf16, #tpu.memory_space<vmem>>, %arg3: memref<1x128xf32, #tpu.memory_space<vmem>>, %arg4: memref<256x128xbf16, #tpu.memory_space<vmem>>) attributes {dimension_semantics = [#tpu.dimension_semantics<parallel>], iteration_bounds = array<i64: 2>, scalar_prefetch = 0 : i64, scratch_operands = 0 : i64, tpu.core_type = #tpu.core_type<tc>, window_params = [{transform_indices = @transform_0, window_bounds = array<i64: 256, 27>}, {pipeline_mode = #tpu.pipeline_mode<synchronous>, transform_indices = @transform_1, window_bounds = array<i64: 27, 128>}, {pipeline_mode = #tpu.pipeline_mode<synchronous>, transform_indices = @transform_2, window_bounds = array<i64: 1, 128>}, {transform_indices = @transform_3, window_bounds = array<i64: 256, 128>}]} {
    %c0 = arith.constant 0 : index
    %c0_0 = arith.constant 0 : index
    %0 = vector.load %arg1[%c0, %c0_0] : memref<256x27xbf16, #tpu.memory_space<vmem>>, vector<256x27xbf16>
    %c0_1 = arith.constant 0 : index
    %c0_2 = arith.constant 0 : index
    %1 = vector.load %arg2[%c0_1, %c0_2] : memref<27x128xbf16, #tpu.memory_space<vmem>>, vector<27x128xbf16>
    %c0_3 = arith.constant 0 : index
    %c0_4 = arith.constant 0 : index
    %2 = vector.load %arg3[%c0_3, %c0_4] : memref<1x128xf32, #tpu.memory_space<vmem>>, vector<1x128xf32>
    %cst = arith.constant dense<0.000000e+00> : vector<256x128xf32>
    %3 = tpu.matmul %0, %1, %cst {dimension_numbers = #tpu.dot_dimension_numbers<[1], [0], [0], [1], [0, 0, 1, 1], [], []>} : vector<256x27xbf16>, vector<27x128xbf16>, vector<256x128xf32> -> vector<256x128xf32>
    %4 = vector.broadcast %2 : vector<1x128xf32> to vector<256x128xf32>
    %5 = arith.addf %3, %4 : vector<256x128xf32>
    %cst_5 = arith.constant 0.000000e+00 : f32
    %6 = vector.broadcast %cst_5 : f32 to vector<256x128xf32>
    %7 = arith.maximumf %5, %6 : vector<256x128xf32>
    %8 = arith.truncf %7 : vector<256x128xf32> to vector<256x128xbf16>
    %c0_6 = arith.constant 0 : index
    %c0_7 = arith.constant 0 : index
    %9 = vector.load %arg4[%c0_6, %c0_7] : memref<256x128xbf16, #tpu.memory_space<vmem>>, vector<256x128xbf16>
    tpu.vector_store %arg4[%c0_6, %c0_7], %8 {strides = array<i32>} : memref<256x128xbf16, #tpu.memory_space<vmem>>, vector<256x128xbf16>,
    return
  }
  func.func @transform_0(%arg0: i32) -> (i32, i32) {
    %c0_i32 = arith.constant 0 : i32
    %c0_i32_0 = arith.constant 0 : i32
    return %arg0, %c0_i32 : i32, i32
  }
  func.func @transform_1(%arg0: i32) -> (i32, i32) {
    %c0_i32 = arith.constant 0 : i32
    %c0_i32_0 = arith.constant 0 : i32
    %c0_i32_1 = arith.constant 0 : i32
    return %c0_i32, %c0_i32_0 : i32, i32
  }
  func.func @transform_2(%arg0: i32) -> (i32, i32) {
    %c0_i32 = arith.constant 0 : i32
    %c0_i32_0 = arith.constant 0 : i32
    %c0_i32_1 = arith.constant 0 : i32
    return %c0_i32, %c0_i32_0 : i32, i32
  }
  func.func @transform_3(%arg0: i32) -> (i32, i32) {
    %c0_i32 = arith.constant 0 : i32
    %c0_i32_0 = arith.constant 0 : i32
    return %arg0, %c0_i32 : i32, i32
  }
}

</mosaic_0001>

<llo_original>
// kernel: tpu_custom_call.1
$region0: #{tpu_custom_call.1}
  #allocation0 [shape = 'u32[]', space=smem, size = 0x4, offset = 0x4, fixed_abs, tag = 'smem constant byte address 0x4 - core index']
  #allocation1 [shape = 'u32[72,128]{1,0:T(1,128)}', space=vmem, size = 0x9000, scoped, tag = 'internal scratch']
  %s0 = inlined_call_operand.vmem [shape: bf16[512,27], index: 0, kind: input, shape index: {}]
  %s1 = inlined_call_operand.vmem [shape: bf16[27,128], index: 1, kind: input, shape index: {}]
  %s2 = inlined_call_operand.vmem [shape: f32[1,128], index: 2, kind: input, shape index: {}]
  %s3 = inlined_call_operand.hbm [shape: bf16[512,128], index: 3, kind: output, shape index: {}]
  %s4 = sld [smem:[#allocation0]]
  $region45: #{tpu_custom_call.1} parent=0
    _
  %s6 = ssub.s32 1, %s4
  %s7 = scalar_select 0, %s6, %s4
  $region1: #{tpu_custom_call.1} parent=0
    #allocation2 [shape = 'u8[131072]{0}', space=vmem, size = 0x20000, scoped, tag = 'output window, operand 0']
    #allocation3 [shape = 's32[2]{0}', space=sflag, size = 0x8, scoped, tag = 'scoped memory for tpu_custom_call.1']
    %8 = vsyncpa [#allocation3], 0
    %s9 = scalar_lea.sflag [#allocation3], 1
    %10 = vsyncpa %s9, 0
    loop: start=0, step=1, limit=4
    $region2: #{tpu_custom_call.1} parent=1 // loop_pre_header
      _
    $region3: #{tpu_custom_call.1} parent=1 // loop_header
      %s12 = sphi 0, %s16
      %p13 = scmp.ge.s32.totalorder %s12, 4
      %s22 = sphi 0, %s24
      %s25 = sphi 0, %s22
      %s26 = sphi 0, %s25
      %s42 = sphi 0, %s26
      %s46 = sphi 0, %s46
      %s48 = sphi 0, %s46
      %s49 = sphi 0, %s48
      %s63 = sphi 0, %s49
      %s67 = sphi 0, %s67
      %s69 = sphi 0, %s67
      %s70 = sphi 0, %s69
      %s84 = sphi 0, %s70
      %s90 = sphi 0, %s92
      %s93 = sphi 0, %s90
      %s94 = sphi 0, %s93
      %s110 = sphi 0, %s94
    $region4: #{tpu_custom_call.1} parent=1 // loop_header_branch
      %15 = sbr.rel (%p13) target = $region8
    $region5: #{tpu_custom_call.1} parent=1 // loop_body
      %s17 = ssub.s32 %s12, 1
      %s18 = ssub.s32 %s12, 2
      %s19 = sadd.s32 %s12, 1
      %s20 = ssub.s32 %s12, %s19
      %p21 = scmp.eq.s32.totalorder %s20, 0
      %s23 = sadd.s32 %s22, 1
      %s24 = scalar_select %p21, %s22, %s23
      %p27 = pneg %p21
      %p28 = scmp.eq.s32.totalorder %s12, 1
      %p29 = por %p27, %p28
      %p30 = scmp.ne.s32.totalorder %s22, %s25
      %p31 = scmp.eq.s32.totalorder %s12, 0
      %p32 = por %p30, %p31
      %p33 = scmp.ne.s32.totalorder %s22, %s25
      %p34 = scmp.eq.s32.totalorder %s17, 1
      %p35 = por %p33, %p34
      %p36 = scmp.ne.s32.totalorder %s25, %s26
      %p37 = scmp.eq.s32.totalorder %s17, 0
      %p38 = por %p36, %p37
      %p39 = scmp.ne.s32.totalorder %s25, %s26
      %p40 = scmp.eq.s32.totalorder %s18, 1
      %p41 = por %p39, %p40
      %p43 = scmp.ne.s32.totalorder %s26, %s42
      %p44 = scmp.eq.s32.totalorder %s18, 0
      %p45 = por %p43, %p44
      %s47 = sadd.s32 %s46, 1
      %p50 = scmp.eq.s32.totalorder %s12, 1
      %p51 = scmp.ne.s32.totalorder %s46, %s48
      %p52 = scmp.eq.s32.totalorder %s12, 0
      %p53 = por %p51, %p52
      %p54 = scmp.ne.s32.totalorder %s46, %s48
      %p55 = scmp.eq.s32.totalorder %s17, 1
      %p56 = por %p54, %p55
      %p57 = scmp.ne.s32.totalorder %s48, %s49
      %p58 = scmp.eq.s32.totalorder %s17, 0
      %p59 = por %p57, %p58
      %p60 = scmp.ne.s32.totalorder %s48, %s49
      %p61 = scmp.eq.s32.totalorder %s18, 1
      %p62 = por %p60, %p61
      %p64 = scmp.ne.s32.totalorder %s49, %s63
      %p65 = scmp.eq.s32.totalorder %s18, 0
      %p66 = por %p64, %p65
      %s68 = sadd.s32 %s67, 1
      %p71 = scmp.eq.s32.totalorder %s12, 1
      %p72 = scmp.ne.s32.totalorder %s67, %s69
      %p73 = scmp.eq.s32.totalorder %s12, 0
      %p74 = por %p72, %p73
      %p75 = scmp.ne.s32.totalorder %s67, %s69
      %p76 = scmp.eq.s32.totalorder %s17, 1
      %p77 = por %p75, %p76
      %p78 = scmp.ne.s32.totalorder %s69, %s70
      %p79 = scmp.eq.s32.totalorder %s17, 0
      %p80 = por %p78, %p79
      %p81 = scmp.ne.s32.totalorder %s69, %s70
      %p82 = scmp.eq.s32.totalorder %s18, 1
      %p83 = por %p81, %p82
      %p85 = scmp.ne.s32.totalorder %s70, %s84
      %p86 = scmp.eq.s32.totalorder %s18, 0
      %p87 = por %p85, %p86
      %s88 = ssub.s32 %s12, %s19
      %p89 = scmp.eq.s32.totalorder %s88, 0
      %s91 = sadd.s32 %s90, 1
      %s92 = scalar_select %p89, %s90, %s91
      %p95 = pneg %p89
      %p96 = scmp.eq.s32.totalorder %s12, 1
      %p97 = por %p95, %p96
      %p98 = scmp.ne.s32.totalorder %s90, %s93
      %p99 = scmp.eq.s32.totalorder %s12, 0
      %p100 = por %p98, %p99
      %p101 = scmp.ne.s32.totalorder %s90, %s93
      %p102 = scmp.eq.s32.totalorder %s17, 1
      %p103 = por %p101, %p102
      %p104 = scmp.ne.s32.totalorder %s93, %s94
      %p105 = scmp.eq.s32.totalorder %s17, 0
      %p106 = por %p104, %p105
      %p107 = scmp.ne.s32.totalorder %s93, %s94
      %p108 = scmp.eq.s32.totalorder %s18, 1
      %p109 = por %p107, %p108
      %p111 = scmp.ne.s32.totalorder %s94, %s110
      %p112 = scmp.eq.s32.totalorder %s18, 0
      %p113 = por %p111, %p112
      %p114 = scmp.le.s32.totalorder 1, %s12
      %p115 = scmp.lt.s32.totalorder %s12, 3
      %p116 = pnand %p114, %p115
      %p117 = pneg %p116
      // Predicated region
      $region9: #{tpu_custom_call.1} parent=5 // pred_check
        _
      $region10: #{tpu_custom_call.1} parent=5 // pred_check_branch
        %119 = sbr.rel (%p116) target = $region12
      $region11: #{tpu_custom_call.1} parent=5 // pred_region
        %s120 = ssub.s32 %s12, 1
        // Predicated region
        $region13: #{tpu_custom_call.1} parent=11 // pred_check
          %p121 = pneg %p59
        $region14: #{tpu_custom_call.1} parent=11 // pred_check_branch
          %123 = sbr.rel (%p121) target = $region16
        $region15: #{tpu_custom_call.1} parent=11 // pred_region
          _
        $region16: #{tpu_custom_call.1} parent=11 // pred_fallthru
          _
        // Predicated region
        $region17: #{tpu_custom_call.1} parent=11 // pred_check
          %p124 = pneg %p80
        $region18: #{tpu_custom_call.1} parent=11 // pred_check_branch
          %126 = sbr.rel (%p124) target = $region20
        $region19: #{tpu_custom_call.1} parent=11 // pred_region
          _
        $region20: #{tpu_custom_call.1} parent=11 // pred_fallthru
          _
      $region12: #{tpu_custom_call.1} parent=5 // pred_fallthru
        _
      %p127 = scmp.lt.s32.totalorder %s12, 2
      // Predicated region
      $region21: #{tpu_custom_call.1} parent=5 // pred_check
        %p128 = pneg %p127
      $region22: #{tpu_custom_call.1} parent=5 // pred_check_branch
        %130 = sbr.rel (%p128) target = $region24
      $region23: #{tpu_custom_call.1} parent=5 // pred_region
        // Predicated region
        $region25: #{tpu_custom_call.1} parent=23 // pred_check
          %p131 = pneg %p32
        $region26: #{tpu_custom_call.1} parent=23 // pred_check_branch
          %133 = sbr.rel (%p131) target = $region28
        $region27: #{tpu_custom_call.1} parent=23 // pred_region
          %s134 = smul.u32 32, %s12
          %p135 = scmp.lt.s32.totalorder %s134, 63
          %s136 = scalar_select %p135, %s134, 63
          %s137 = smul.addr %s136, 4
          %s138 = scalar_lea.vmem %s0, %s137
          %s139 = smul.u32 32, %s12
        $region28: #{tpu_custom_call.1} parent=23 // pred_fallthru
          _
      $region24: #{tpu_custom_call.1} parent=5 // pred_fallthru
        _
      %p140 = scmp.le.s32.totalorder 1, %s12
      %p141 = scmp.lt.s32.totalorder %s12, 3
      %p142 = pnand %p140, %p141
      %p143 = pneg %p142
      // Predicated region
      $region29: #{tpu_custom_call.1} parent=5 // pred_check
        _
      $region30: #{tpu_custom_call.1} parent=5 // pred_check_branch
        %145 = sbr.rel (%p142) target = $region32
      $region31: #{tpu_custom_call.1} parent=5 // pred_region
        %s146 = ssub.s32 %s12, 1
        %s147 = smul.u32 32, %s17
        %p148 = scmp.lt.s32.totalorder %s147, 63
        %s149 = scalar_select %p148, %s147, 63
        %s150 = smul.addr %s149, 4
        %s151 = scalar_lea.vmem %s0, %s150
        %p152 = pneg %p38
        %p153 = pneg %p35
        %p154 = pneg %p59
        %p155 = pneg %p56
        %p156 = pneg %p80
        %p157 = pneg %p77
        %p158 = pneg %p106
        %p159 = pneg %p103
        %s160 = sand.u32 %s93, 1
        %s161 = scalar_lea.sflag [#allocation3], %s160
        %s162 = sand.u32 %s93, 1
        %s163 = smul.addr %s162, 128
        %s164 = scalar_lea.vmem [#allocation2], %s163
        %s165 = smul.u32 32, %s17
        %p166 = scmp.lt.s32.totalorder %s165, 63
        %s167 = scalar_select %p166, %s165, 63
        %s168 = smul.addr %s167, 4
        %s169 = scalar_lea.vmem %s0, %s168
        %s170 = smul.u32 32, %s17
        %s171 = smul.u32 32, %s17
        %v173 = vld [vmem:[%s169] sm:$0xf]
        %v174 = vld [vmem:[%s169 + $0x4] sm:$0xf]
        %v175 = vld [vmem:[%s169 + $0x8] sm:$0xf]
        %v176 = vld [vmem:[%s169 + $0xc] sm:$0xf]
        %v177 = vld [vmem:[%s169 + $0x10] sm:$0xf]
        %v178 = vld [vmem:[%s169 + $0x14] sm:$0xf]
        %v179 = vld [vmem:[%s169 + $0x18] sm:$0xf]
        %v180 = vld [vmem:[%s169 + $0x1c] sm:$0xf]
        %v181 = vld [vmem:[%s169 + $0x20] sm:$0xf]
        %v182 = vld [vmem:[%s169 + $0x24] sm:$0xf]
        %v183 = vld [vmem:[%s169 + $0x28] sm:$0xf]
        %v184 = vld [vmem:[%s169 + $0x2c] sm:$0xf]
        %v185 = vld [vmem:[%s169 + $0x30] sm:$0xf]
        %v186 = vld [vmem:[%s169 + $0x34] sm:$0xf]
        %v187 = vld [vmem:[%s169 + $0x38] sm:$0xf]
        %v188 = vld [vmem:[%s169 + $0x3c] sm:$0xf]
        %v189 = vld [vmem:[%s169 + $0x40] sm:$0xf]
        %v190 = vld [vmem:[%s169 + $0x44] sm:$0xf]
        %v191 = vld [vmem:[%s169 + $0x48] sm:$0xf]
        %v192 = vld [vmem:[%s169 + $0x4c] sm:$0xf]
        %v193 = vld [vmem:[%s169 + $0x50] sm:$0xf]
        %v194 = vld [vmem:[%s169 + $0x54] sm:$0xf]
        %v195 = vld [vmem:[%s169 + $0x58] sm:$0xf]
        %v196 = vld [vmem:[%s169 + $0x5c] sm:$0xf]
        %v197 = vld [vmem:[%s169 + $0x60] sm:$0xf]
        %v198 = vld [vmem:[%s169 + $0x64] sm:$0xf]
        %v199 = vld [vmem:[%s169 + $0x68] sm:$0xf]
        %v200 = vld [vmem:[%s169 + $0x6c] sm:$0xf]
        %v201 = vld [vmem:[%s169 + $0x70] sm:$0xf]
        %v202 = vld [vmem:[%s169 + $0x74] sm:$0xf]
        %v203 = vld [vmem:[%s169 + $0x78] sm:$0xf]
        %v204 = vld [vmem:[%s169 + $0x7c] sm:$0xf]
        %v205 = vld [vmem:[%s1] sm:$0xf]
        %v206 = vld [vmem:[%s1 + $0x4] sm:$0xf]
        %v207 = vld [vmem:[%s1 + $0x8] sm:$0xf]
        %v208 = vld [vmem:[%s1 + $0xc] sm:$0x3]
        %v209 = vld [vmem:[%s2] sm:$0x1]
        %v211 = vperm.slane %v209, 0
        %v245 = vunpack.c.l.b16 %v173
        %v246 = vunpack.c.l.b16 %v174
        %v247 = vunpack.c.l.b16 %v175
        %v248 = vunpack.c.l.b16 %v176
        %v249 = vunpack.c.l.b16 %v177
        %v250 = vunpack.c.l.b16 %v178
        %v251 = vunpack.c.l.b16 %v179
        %v252 = vunpack.c.l.b16 %v180
        %v253 = vunpack.c.l.b16 %v181
        %v254 = vunpack.c.l.b16 %v182
        %v255 = vunpack.c.l.b16 %v183
        %v256 = vunpack.c.l.b16 %v184
        %v257 = vunpack.c.l.b16 %v185
        %v258 = vunpack.c.l.b16 %v186
        %v259 = vunpack.c.l.b16 %v187
        %v260 = vunpack.c.l.b16 %v188
        %v261 = vunpack.c.l.b16 %v189
        %v262 = vunpack.c.l.b16 %v190
        %v263 = vunpack.c.l.b16 %v191
        %v264 = vunpack.c.l.b16 %v192
        %v265 = vunpack.c.l.b16 %v193
        %v266 = vunpack.c.l.b16 %v194
        %v267 = vunpack.c.l.b16 %v195
        %v268 = vunpack.c.l.b16 %v196
        %v269 = vunpack.c.l.b16 %v197
        %v270 = vunpack.c.l.b16 %v198
        %v271 = vunpack.c.l.b16 %v199
        %v272 = vunpack.c.l.b16 %v200
        %v273 = vunpack.c.l.b16 %v201
        %v274 = vunpack.c.l.b16 %v202
        %v275 = vunpack.c.l.b16 %v203
        %v276 = vunpack.c.l.b16 %v204
        %v277 = vpack.c.b16 %v246, %v245
        %v278 = vpack.c.b16 %v248, %v247
        %v279 = vpack.c.b16 %v250, %v249
        %v280 = vpack.c.b16 %v252, %v251
        %v281 = vpack.c.b16 %v254, %v253
        %v282 = vpack.c.b16 %v256, %v255
        %v283 = vpack.c.b16 %v258, %v257
        %v284 = vpack.c.b16 %v260, %v259
        %v285 = vpack.c.b16 %v262, %v261
        %v286 = vpack.c.b16 %v264, %v263
        %v287 = vpack.c.b16 %v266, %v265
        %v288 = vpack.c.b16 %v268, %v267
        %v289 = vpack.c.b16 %v270, %v269
        %v290 = vpack.c.b16 %v272, %v271
        %v291 = vpack.c.b16 %v274, %v273
        %v292 = vpack.c.b16 %v276, %v275
        %v297 = vunpack.c.l.b16 %v205
        %v298 = vunpack.c.l.b16 %v206
        %v299 = vunpack.c.l.b16 %v207
        %v300 = vunpack.c.l.b16 %v208
        %v301 = vpack.c.b16 %v298, %v297
        %v302 = vpack.c.b16 %v300, %v299
        %vm304 = vcmask 220160
        %v306 = vsel %vm304, %v277, 0
        %v309 = vsel %vm304, %v278, 0
        %v312 = vsel %vm304, %v279, 0
        %v315 = vsel %vm304, %v280, 0
        %v318 = vsel %vm304, %v281, 0
        %v321 = vsel %vm304, %v282, 0
        %v324 = vsel %vm304, %v283, 0
        %v327 = vsel %vm304, %v284, 0
        %v330 = vsel %vm304, %v285, 0
        %v333 = vsel %vm304, %v286, 0
        %v336 = vsel %vm304, %v287, 0
        %v339 = vsel %vm304, %v288, 0
        %v342 = vsel %vm304, %v289, 0
        %v345 = vsel %vm304, %v290, 0
        %v348 = vsel %vm304, %v291, 0
        %v351 = vsel %vm304, %v292, 0
        %vm353 = vcmask 1044480
        %vm354 = vcmask 1045504
        %v355 = vsel %vm353, 4294967295, 65535
        %v356 = vsel %vm354, %v355, 0
        %v358 = vand.u32 %v302, %v356
        %360 = vmatpush.bf16.msra.mxu0 0
        %361 = vmatpush.bf16.msra.mxu0 0
        %362 = vmatpush.bf16.msra.mxu0 0
        %363 = vmatpush.bf16.msra.mxu0 0
        %364 = vmatpush.bf16.msra.mxu0 0
        %365 = vmatpush.bf16.msra.mxu0 0
        %366 = vmatpush.bf16.msra.mxu0 %v358
        %367 = vmatpush.bf16.msra.mxu0 %v301
        %368 = vmatmul.bf16.gmra.mxu0 %v306
        %v369 = vpop.f32.mrf.mxu0
        %v370 = vadd.f32 %v211, %v369
        %v371 = vpop.f32.mrf.mxu0
        %v372 = vadd.f32 %v211, %v371
        %373 = vmatmul.bf16.gmra.mxu0 %v309
        %v374 = vpop.f32.mrf.mxu0
        %v375 = vadd.f32 %v211, %v374
        %v376 = vpop.f32.mrf.mxu0
        %v377 = vadd.f32 %v211, %v376
        %378 = vmatmul.bf16.gmra.mxu0 %v312
        %v379 = vpop.f32.mrf.mxu0
        %v380 = vadd.f32 %v211, %v379
        %v381 = vpop.f32.mrf.mxu0
        %v382 = vadd.f32 %v211, %v381
        %383 = vmatmul.bf16.gmra.mxu0 %v315
        %v384 = vpop.f32.mrf.mxu0
        %v385 = vadd.f32 %v211, %v384
        %v386 = vpop.f32.mrf.mxu0
        %v387 = vadd.f32 %v211, %v386
        %388 = vmatmul.bf16.gmra.mxu0 %v318
        %v389 = vpop.f32.mrf.mxu0
        %v390 = vadd.f32 %v211, %v389
        %v391 = vpop.f32.mrf.mxu0
        %v392 = vadd.f32 %v211, %v391
        %393 = vmatmul.bf16.gmra.mxu0 %v321
        %v394 = vpop.f32.mrf.mxu0
        %v395 = vadd.f32 %v211, %v394
        %v396 = vpop.f32.mrf.mxu0
        %v397 = vadd.f32 %v211, %v396
        %398 = vmatmul.bf16.gmra.mxu0 %v324
        %v399 = vpop.f32.mrf.mxu0
        %v400 = vadd.f32 %v211, %v399
        %v401 = vpop.f32.mrf.mxu0
        %v402 = vadd.f32 %v211, %v401
        %403 = vmatmul.bf16.gmra.mxu0 %v327
        %v404 = vpop.f32.mrf.mxu0
        %v405 = vadd.f32 %v211, %v404
        %v406 = vpop.f32.mrf.mxu0
        %v407 = vadd.f32 %v211, %v406
        %408 = vmatmul.bf16.gmra.mxu0 %v330
        %v409 = vpop.f32.mrf.mxu0
        %v410 = vadd.f32 %v211, %v409
        %v411 = vpop.f32.mrf.mxu0
        %v412 = vadd.f32 %v211, %v411
        %413 = vmatmul.bf16.gmra.mxu0 %v333
        %v414 = vpop.f32.mrf.mxu0
        %v415 = vadd.f32 %v211, %v414
        %v416 = vpop.f32.mrf.mxu0
        %v417 = vadd.f32 %v211, %v416
        %418 = vmatmul.bf16.gmra.mxu0 %v336
        %v419 = vpop.f32.mrf.mxu0
        %v420 = vadd.f32 %v211, %v419
        %v421 = vpop.f32.mrf.mxu0
        %v422 = vadd.f32 %v211, %v421
        %423 = vmatmul.bf16.gmra.mxu0 %v339
        %v424 = vpop.f32.mrf.mxu0
        %v425 = vadd.f32 %v211, %v424
        %v426 = vpop.f32.mrf.mxu0
        %v427 = vadd.f32 %v211, %v426
        %428 = vmatmul.bf16.gmra.mxu0 %v342
        %v429 = vpop.f32.mrf.mxu0
        %v430 = vadd.f32 %v211, %v429
        %v431 = vpop.f32.mrf.mxu0
        %v432 = vadd.f32 %v211, %v431
        %433 = vmatmul.bf16.gmra.mxu0 %v345
        %v434 = vpop.f32.mrf.mxu0
        %v435 = vadd.f32 %v211, %v434
        %v436 = vpop.f32.mrf.mxu0
        %v437 = vadd.f32 %v211, %v436
        %438 = vmatmul.bf16.gmra.mxu0 %v348
        %v439 = vpop.f32.mrf.mxu0
        %v440 = vadd.f32 %v211, %v439
        %v441 = vpop.f32.mrf.mxu0
        %v442 = vadd.f32 %v211, %v441
        %443 = vmatmul.bf16.gmra.mxu0 %v351
        %v444 = vpop.f32.mrf.mxu0
        %v445 = vadd.f32 %v211, %v444
        %v446 = vpop.f32.mrf.mxu0
        %v447 = vadd.f32 %v211, %v446
        %448 = vdwg.mxu0
        %v449 = vmax.f32 %v370, 0.0
        %v450 = vmax.f32 %v372, 0.0
        %v451 = vmax.f32 %v375, 0.0
        %v452 = vmax.f32 %v377, 0.0
        %v453 = vmax.f32 %v380, 0.0
        %v454 = vmax.f32 %v382, 0.0
        %v455 = vmax.f32 %v385, 0.0
        %v456 = vmax.f32 %v387, 0.0
        %v457 = vmax.f32 %v390, 0.0
        %v458 = vmax.f32 %v392, 0.0
        %v459 = vmax.f32 %v395, 0.0
        %v460 = vmax.f32 %v397, 0.0
        %v461 = vmax.f32 %v400, 0.0
        %v462 = vmax.f32 %v402, 0.0
        %v463 = vmax.f32 %v405, 0.0
        %v464 = vmax.f32 %v407, 0.0
        %v465 = vmax.f32 %v410, 0.0
        %v466 = vmax.f32 %v412, 0.0
        %v467 = vmax.f32 %v415, 0.0
        %v468 = vmax.f32 %v417, 0.0
        %v469 = vmax.f32 %v420, 0.0
        %v470 = vmax.f32 %v422, 0.0
        %v471 = vmax.f32 %v425, 0.0
        %v472 = vmax.f32 %v427, 0.0
        %v473 = vmax.f32 %v430, 0.0
        %v474 = vmax.f32 %v432, 0.0
        %v475 = vmax.f32 %v435, 0.0
        %v476 = vmax.f32 %v437, 0.0
        %v477 = vmax.f32 %v440, 0.0
        %v478 = vmax.f32 %v442, 0.0
        %v479 = vmax.f32 %v445, 0.0
        %v480 = vmax.f32 %v447, 0.0
        %v481 = vpack.c.bf16 %v449, %v449
        %v482 = vpack.c.bf16 %v450, %v450
        %v483 = vpack.c.bf16 %v451, %v451
        %v484 = vpack.c.bf16 %v452, %v452
        %v485 = vpack.c.bf16 %v453, %v453
        %v486 = vpack.c.bf16 %v454, %v454
        %v487 = vpack.c.bf16 %v455, %v455
        %v488 = vpack.c.bf16 %v456, %v456
        %v489 = vpack.c.bf16 %v457, %v457
        %v490 = vpack.c.bf16 %v458, %v458
        %v491 = vpack.c.bf16 %v459, %v459
        %v492 = vpack.c.bf16 %v460, %v460
        %v493 = vpack.c.bf16 %v461, %v461
        %v494 = vpack.c.bf16 %v462, %v462
        %v495 = vpack.c.bf16 %v463, %v463
        %v496 = vpack.c.bf16 %v464, %v464
        %v497 = vpack.c.bf16 %v465, %v465
        %v498 = vpack.c.bf16 %v466, %v466
        %v499 = vpack.c.bf16 %v467, %v467
        %v500 = vpack.c.bf16 %v468, %v468
        %v501 = vpack.c.bf16 %v469, %v469
        %v502 = vpack.c.bf16 %v470, %v470
        %v503 = vpack.c.bf16 %v471, %v471
        %v504 = vpack.c.bf16 %v472, %v472
        %v505 = vpack.c.bf16 %v473, %v473
        %v506 = vpack.c.bf16 %v474, %v474
        %v507 = vpack.c.bf16 %v475, %v475
        %v508 = vpack.c.bf16 %v476, %v476
        %v509 = vpack.c.bf16 %v477, %v477
        %v510 = vpack.c.bf16 %v478, %v478
        %v511 = vpack.c.bf16 %v479, %v479
        %v512 = vpack.c.bf16 %v480, %v480
        %513 = vst [vmem:[%s164] sm:$0xf] %v481
        %514 = vst [vmem:[%s164 + $0x4] sm:$0xf] %v482
        %515 = vst [vmem:[%s164 + $0x8] sm:$0xf] %v483
        %516 = vst [vmem:[%s164 + $0xc] sm:$0xf] %v484
        %517 = vst [vmem:[%s164 + $0x10] sm:$0xf] %v485
        %518 = vst [vmem:[%s164 + $0x14] sm:$0xf] %v486
        %519 = vst [vmem:[%s164 + $0x18] sm:$0xf] %v487
        %520 = vst [vmem:[%s164 + $0x1c] sm:$0xf] %v488
        %521 = vst [vmem:[%s164 + $0x20] sm:$0xf] %v489
        %522 = vst [vmem:[%s164 + $0x24] sm:$0xf] %v490
        %523 = vst [vmem:[%s164 + $0x28] sm:$0xf] %v491
        %524 = vst [vmem:[%s164 + $0x2c] sm:$0xf] %v492
        %525 = vst [vmem:[%s164 + $0x30] sm:$0xf] %v493
        %526 = vst [vmem:[%s164 + $0x34] sm:$0xf] %v494
        %527 = vst [vmem:[%s164 + $0x38] sm:$0xf] %v495
        %528 = vst [vmem:[%s164 + $0x3c] sm:$0xf] %v496
        %529 = vst [vmem:[%s164 + $0x40] sm:$0xf] %v497
        %530 = vst [vmem:[%s164 + $0x44] sm:$0xf] %v498
        %531 = vst [vmem:[%s164 + $0x48] sm:$0xf] %v499
        %532 = vst [vmem:[%s164 + $0x4c] sm:$0xf] %v500
        %533 = vst [vmem:[%s164 + $0x50] sm:$0xf] %v501
        %534 = vst [vmem:[%s164 + $0x54] sm:$0xf] %v502
        %535 = vst [vmem:[%s164 + $0x58] sm:$0xf] %v503
        %536 = vst [vmem:[%s164 + $0x5c] sm:$0xf] %v504
        %537 = vst [vmem:[%s164 + $0x60] sm:$0xf] %v505
        %538 = vst [vmem:[%s164 + $0x64] sm:$0xf] %v506
        %539 = vst [vmem:[%s164 + $0x68] sm:$0xf] %v507
        %540 = vst [vmem:[%s164 + $0x6c] sm:$0xf] %v508
        %541 = vst [vmem:[%s164 + $0x70] sm:$0xf] %v509
        %542 = vst [vmem:[%s164 + $0x74] sm:$0xf] %v510
        %543 = vst [vmem:[%s164 + $0x78] sm:$0xf] %v511
        %544 = vst [vmem:[%s164 + $0x7c] sm:$0xf] %v512
        %s545 = sand.u32 %s93, 1
        %s546 = scalar_lea.sflag [#allocation3], %s545
        %s547 = sand.u32 %s93, 1
        %s548 = smul.addr %s547, 128
        %s549 = scalar_lea.vmem [#allocation2], %s548
        // Predicated region
        $region33: #{tpu_custom_call.1} parent=31 // pred_check
          %p550 = pneg %p103
        $region34: #{tpu_custom_call.1} parent=31 // pred_check_branch
          %552 = sbr.rel (%p550) target = $region36
        $region35: #{tpu_custom_call.1} parent=31 // pred_region
          %s553 = smul.u32 32, %s17
          %555 = vsyncadd %s546, 0
          %s556 = smul.addr %s553, 4
          %s557 = scalar_lea.hbm %s3, %s556
          %s558 = sshll.u32 %s549, 4
          %s559 = int_to_ptr.vmem [resolvable:$true] %s558
          %s560 = sshll.u32 %s557, 4
          %s561 = int_to_ptr.hbm [resolvable:$true] %s560
          %566 = dma.vmem_to_hbm [thread:$0]  %s559, 2048, %s561, %s546, 64, 64, 4
        $region36: #{tpu_custom_call.1} parent=31 // pred_fallthru
          _
      $region32: #{tpu_custom_call.1} parent=5 // pred_fallthru
        _
      %p567 = scmp.le.s32.totalorder 2, %s12
      // Predicated region
      $region37: #{tpu_custom_call.1} parent=5 // pred_check
        %p568 = pneg %p567
      $region38: #{tpu_custom_call.1} parent=5 // pred_check_branch
        %570 = sbr.rel (%p568) target = $region40
      $region39: #{tpu_custom_call.1} parent=5 // pred_region
        %s571 = ssub.s32 %s12, 2
        // Predicated region
        $region41: #{tpu_custom_call.1} parent=39 // pred_check
          %p572 = pneg %p109
        $region42: #{tpu_custom_call.1} parent=39 // pred_check_branch
          %574 = sbr.rel (%p572) target = $region44
        $region43: #{tpu_custom_call.1} parent=39 // pred_region
          %s575 = sand.u32 %s94, 1
          %s576 = scalar_lea.sflag [#allocation3], %s575
          %s577 = sand.u32 %s94, 1
          %s578 = smul.addr %s577, 128
          %s579 = scalar_lea.vmem [#allocation2], %s578
          %581 = dma.done %s576, 2048
        $region44: #{tpu_custom_call.1} parent=39 // pred_fallthru
          _
      $region40: #{tpu_custom_call.1} parent=5 // pred_fallthru
        _
    $region6: #{tpu_custom_call.1} parent=1 // loop_footer
      %s16 = sadd.s32 1, %s12
    $region7: #{tpu_custom_call.1} parent=1 // loop_footer_branch
      %11 = sbr.rel target = $region3
    $region8: #{tpu_custom_call.1} parent=1 // loop_exit
      _
    %582 = vsyncpa [#allocation3], 1
    %s583 = scalar_lea.sflag [#allocation3], 1
    %584 = vsyncpa %s583, 1

</llo_original>
